<compile_context>
chip_gen: v7x
topology: tpu7x:2x2x1
jax: 0.10.0
libtpu: 0.0.40
codegen_flags: <defaults>
</compile_context>

<pallas_src>
import jax
import jax.numpy as jnp
from jax.experimental import pallas as pl
from jax.experimental.pallas import tpu as pltpu

HD = 32   # hd (d_model of the surrounding mesh transformer)


def _vmem():
    return pl.BlockSpec(memory_space=pltpu.MemorySpace.VMEM)


# ---------------------------- Pallas kernel ---------------------------------
def block_concat_kernel(be_ref, x_ref, fms_ref, xo_ref, fo_ref):
    # be_ref : [1, H]      block embedding parameter (pre-flattened)
    # x_ref  : [B, S, H]   activations
    # fms_ref: [B, S]      per-position features/mask
    # xo_ref : [B, S+1, H] = cat(block_embedding.repeat(B,1,1), x, dim=1)
    # fo_ref : [B, S+1]    = ConstantPad1d((1, 0), 0.0)(fms)
    B, S, H = x_ref.shape

    # Build the concatenated activation block in registers, store once.
    be = jnp.broadcast_to(be_ref[...][None, :, :], (B, 1, H)).astype(xo_ref.dtype)
    xo_ref[...] = jnp.concatenate([be, x_ref[...].astype(xo_ref.dtype)], axis=1)

    # Left-pad fms with a single zero column, built in registers, stored once.
    zero_col = jnp.zeros((B, 1), dtype=fo_ref.dtype)
    fo_ref[...] = jnp.concatenate([zero_col, fms_ref[...].astype(fo_ref.dtype)],
                                  axis=1)


# ------------------------------ wrapper --------------------------------------
def block_concat(x, fms, block_embedding):
    """x: [B, S, H], fms: [B, S], block_embedding: [1, 1, H] parameter."""
    B, S, H = x.shape
    be2d = block_embedding.reshape(1, H)   # free reshape outside the kernel

    out_shapes = (
        jax.ShapeDtypeStruct((B, S + 1, H), x.dtype),
        jax.ShapeDtypeStruct((B, S + 1), fms.dtype),
    )

    bytes_accessed = (
        be2d.size * be2d.dtype.itemsize
        + x.size * x.dtype.itemsize
        + fms.size * fms.dtype.itemsize
        + B * (S + 1) * H * x.dtype.itemsize
        + B * (S + 1) * fms.dtype.itemsize
    )

    return pl.pallas_call(
        block_concat_kernel,
        out_shape=out_shapes,
        in_specs=[_vmem(), _vmem(), _vmem()],
        out_specs=(_vmem(), _vmem()),
        cost_estimate=pl.CostEstimate(
            flops=0, transcendentals=0, bytes_accessed=bytes_accessed),
    )(be2d, x, fms)


# ---------------------------- reference (pure JAX) ---------------------------
def _ref_block_concat(x, fms, block_embedding):
    B, _, H = x.shape
    be = jnp.broadcast_to(block_embedding.reshape(1, 1, H), (B, 1, H)).astype(x.dtype)
    x_out = jnp.concatenate([be, x], axis=1)
    fms_out = jnp.pad(fms, ((0, 0), (1, 0)))
    return x_out, fms_out


# ------------------------------- main ----------------------------------------
if __name__ == "__main__":
    key = jax.random.PRNGKey(0)
    kbe, kx, kf = jax.random.split(key, 3)

    B, S = 2, 8

    # BlockEmbedding parameter: xavier_uniform_ on a (1, 1, HD) tensor.
    bound = (6.0 / (1.0 + HD)) ** 0.5
    block_embedding = jax.random.uniform(
        kbe, (1, 1, HD), jnp.float32, minval=-bound, maxval=bound)

    x = jax.random.normal(kx, (B, S, HD), dtype=jnp.float32)
    fms = jax.random.normal(kf, (B, S), dtype=jnp.float32)

    x_out, fms_out = block_concat(x, fms, block_embedding)
    x_out, fms_out = jax.block_until_ready((x_out, fms_out))

    rx, rf = _ref_block_concat(x, fms, block_embedding)
    assert x_out.shape == (B, S + 1, HD) and x_out.dtype == jnp.float32
    assert fms_out.shape == (B, S + 1) and fms_out.dtype == jnp.float32
    assert jnp.array_equal(x_out, rx), "x_out mismatch vs JAX reference"
    assert jnp.array_equal(fms_out, rf), "fms_out mismatch vs JAX reference"

    print("KERNEL_OK")
</pallas_src>

<mosaic_0001>
module attributes {stable_mosaic.version = 11 : i64} {
  func.func @block_concat_kernel(%arg0: memref<1x32xf32, #tpu.memory_space<vmem>>, %arg1: memref<2x8x32xf32, #tpu.memory_space<vmem>>, %arg2: memref<2x8xf32, #tpu.memory_space<vmem>>, %arg3: memref<2x9x32xf32, #tpu.memory_space<vmem>>, %arg4: memref<2x9xf32, #tpu.memory_space<vmem>>) attributes {dimension_semantics = [], scalar_prefetch = 0 : i64, scratch_operands = 0 : i64, tpu.core_type = #tpu.core_type<tc>} {
    %c0 = arith.constant 0 : index
    %c0_0 = arith.constant 0 : index
    %0 = vector.load %arg0[%c0, %c0_0] : memref<1x32xf32, #tpu.memory_space<vmem>>, vector<1x32xf32>
    %1 = vector.shape_cast %0 : vector<1x32xf32> to vector<1x1x32xf32>
    %2 = vector.shape_cast %1 : vector<1x1x32xf32> to vector<1x1x32xf32>
    %3 = vector.broadcast %2 : vector<1x1x32xf32> to vector<2x1x32xf32>
    %c0_1 = arith.constant 0 : index
    %c0_2 = arith.constant 0 : index
    %c0_3 = arith.constant 0 : index
    %4 = vector.load %arg1[%c0_1, %c0_2, %c0_3] : memref<2x8x32xf32, #tpu.memory_space<vmem>>, vector<2x8x32xf32>
    %5 = tpu.concatenate %3, %4 in 1 : vector<2x1x32xf32>, vector<2x8x32xf32> -> vector<2x9x32xf32>
    %c0_4 = arith.constant 0 : index
    %c0_5 = arith.constant 0 : index
    %c0_6 = arith.constant 0 : index
    %6 = vector.load %arg3[%c0_4, %c0_5, %c0_6] : memref<2x9x32xf32, #tpu.memory_space<vmem>>, vector<2x9x32xf32>
    tpu.vector_store %arg3[%c0_4, %c0_5, %c0_6], %5 {strides = array<i32>} : memref<2x9x32xf32, #tpu.memory_space<vmem>>, vector<2x9x32xf32>,
    %cst = arith.constant 0.000000e+00 : f32
    %7 = vector.broadcast %cst : f32 to vector<2x1xf32>
    %c0_7 = arith.constant 0 : index
    %c0_8 = arith.constant 0 : index
    %8 = vector.load %arg2[%c0_7, %c0_8] : memref<2x8xf32, #tpu.memory_space<vmem>>, vector<2x8xf32>
    %9 = tpu.concatenate %7, %8 in 1 : vector<2x1xf32>, vector<2x8xf32> -> vector<2x9xf32>
    %c0_9 = arith.constant 0 : index
    %c0_10 = arith.constant 0 : index
    %10 = vector.load %arg4[%c0_9, %c0_10] : memref<2x9xf32, #tpu.memory_space<vmem>>, vector<2x9xf32>
    tpu.vector_store %arg4[%c0_9, %c0_10], %9 {strides = array<i32>} : memref<2x9xf32, #tpu.memory_space<vmem>>, vector<2x9xf32>,
    return
  }
}

</mosaic_0001>

<llo_original>
// kernel: tpu_custom_call.1
$region0: #{tpu_custom_call.1}
  #allocation0 [shape = 'u32[]', space=smem, size = 0x4, offset = 0x4, fixed_abs, tag = 'smem constant byte address 0x4 - core index']
  #allocation1 [shape = 'u32[144,128]{1,0:T(1,128)}', space=vmem, size = 0x12000, scoped, tag = 'internal scratch']
  %s0 = inlined_call_operand.hbm [shape: f32[1,32], index: 0, kind: input, shape index: {}]
  %s1 = inlined_call_operand.hbm [shape: f32[2,8,32], index: 1, kind: input, shape index: {}]
  %s2 = inlined_call_operand.vmem [shape: f32[2,8], index: 2, kind: input, shape index: {}]
  %s3 = inlined_call_operand.vmem [shape: f32[2,9,32], index: 3, kind: output, shape index: {0}]
  %s4 = inlined_call_operand.hbm [shape: f32[2,9], index: 4, kind: output, shape index: {1}]
  %5 = xla_tuple %s3, %s4
  %s6 = sld [smem:[#allocation0]]
  $region38: #{tpu_custom_call.1} parent=0
    _
  %s8 = ssub.s32 1, %s6
  %s9 = scalar_select 0, %s8, %s6
  $region1: #{tpu_custom_call.1} parent=0
    #allocation2 [shape = 'u8[512]{0}', space=vmem, size = 0x400, scoped, tag = 'input window, operand 0, single buffered']
    #allocation3 [shape = 's32[1]{0}', space=sflag, size = 0x4, scoped, tag = 'scoped memory for tpu_custom_call.1']
    #allocation4 [shape = 's32[1]{0}', space=sflag, size = 0x4, scoped, tag = 'scoped memory for tpu_custom_call.1']
    #allocation5 [shape = 'u8[8192]{0}', space=vmem, size = 0x2000, scoped, tag = 'input window, operand 1, single buffered']
    #allocation6 [shape = 's32[1]{0}', space=sflag, size = 0x4, scoped, tag = 'scoped memory for tpu_custom_call.1']
    #allocation7 [shape = 'u8[1024]{0}', space=vmem, size = 0x400, scoped, tag = 'output window, operand 1, single buffered']
    %10 = vsyncpa [#allocation3], 0
    %11 = vsyncpa [#allocation6], 0
    %12 = vsyncpa [#allocation4], 0
    // Predicated region
    $region2: #{tpu_custom_call.1} parent=1 // pred_check
      _
    $region3: #{tpu_custom_call.1} parent=1 // pred_check_branch
      %14 = sbr.rel (0) target = $region5
    $region4: #{tpu_custom_call.1} parent=1 // pred_region
      %s16 = ssub.s32 16, 16
      %17 = vsyncadd [#allocation3], %s16
      %s19 = sshll.u32 [#allocation2], 4
      %s20 = int_to_ptr.vmem [resolvable:$true] %s19
      %22 = dma.hbm_to_vmem [thread:$0]  %s0, 16, %s20, [#allocation3]
    $region5: #{tpu_custom_call.1} parent=1 // pred_fallthru
      _
    // Predicated region
    $region6: #{tpu_custom_call.1} parent=1 // pred_check
      _
    $region7: #{tpu_custom_call.1} parent=1 // pred_check_branch
      %24 = sbr.rel (0) target = $region9
    $region8: #{tpu_custom_call.1} parent=1 // pred_region
      %s26 = ssub.s32 256, 256
      %27 = vsyncadd [#allocation6], %s26
      %s28 = sshll.u32 [#allocation5], 4
      %s29 = int_to_ptr.vmem [resolvable:$true] %s28
      %34 = dma.hbm_to_vmem [thread:$0]  %s1, 256, %s29, [#allocation6], 128, 128, 8
    $region9: #{tpu_custom_call.1} parent=1 // pred_fallthru
      _
    // Predicated region
    $region10: #{tpu_custom_call.1} parent=1 // pred_check
      _
    $region11: #{tpu_custom_call.1} parent=1 // pred_check_branch
      %36 = sbr.rel (0) target = $region13
    $region12: #{tpu_custom_call.1} parent=1 // pred_region
      _
    $region13: #{tpu_custom_call.1} parent=1 // pred_fallthru
      _
    // Predicated region
    $region14: #{tpu_custom_call.1} parent=1 // pred_check
      _
    $region15: #{tpu_custom_call.1} parent=1 // pred_check_branch
      %38 = sbr.rel (0) target = $region17
    $region16: #{tpu_custom_call.1} parent=1 // pred_region
      %39 = dma.done [#allocation3], 16
    $region17: #{tpu_custom_call.1} parent=1 // pred_fallthru
      _
    // Predicated region
    $region18: #{tpu_custom_call.1} parent=1 // pred_check
      _
    $region19: #{tpu_custom_call.1} parent=1 // pred_check_branch
      %41 = sbr.rel (0) target = $region21
    $region20: #{tpu_custom_call.1} parent=1 // pred_region
      %42 = dma.done [#allocation6], 256
    $region21: #{tpu_custom_call.1} parent=1 // pred_fallthru
      _
    %v43 = vld [vmem:[#allocation2] sm:$0x1]
    %v44 = vld [vmem:[#allocation5] sm:$0xff]
    %v45 = vld [vmem:[#allocation5 + $0x8] sm:$0xff]
    %v48 = vrot.slane %v44, 7
    %v49 = vrot.slane %v45, 7
    %vm52 = vcmask 1040384
    %v53 = vsel %vm52, %v43, %v48
    %v54 = vsel %vm52, %v43, %v49
    %vm55 = vcmask 261120
    %56 = vst.msk [vmem:[%s3] sm:$0xff] %vm55, %v53
    %vm57 = vcmask 253952
    %58 = vst.msk [vmem:[%s3 + $0x8] sm:$0x1] %vm57, %v48
    %59 = vst.msk [vmem:[%s3 + $0x10] sm:$0xff] %vm55, %v54
    %60 = vst.msk [vmem:[%s3 + $0x18] sm:$0x1] %vm57, %v49
    %v61 = vld [vmem:[%s2] sm:$0x3]
    %63 = vrot.lane.b32.xlu0 %v61, 1
    %v64 = vpop.permute.xlu0 %63
    %vm66 = vcmask 7168
    %v67 = vsel %vm66, 0.0, %v64
    %vm68 = vcmask 66560
    %69 = vst.msk [vmem:[#allocation7] sm:$0x3] %vm68, %v67
    // Predicated region
    $region22: #{tpu_custom_call.1} parent=1 // pred_check
      _
    $region23: #{tpu_custom_call.1} parent=1 // pred_check_branch
      %71 = sbr.rel (0) target = $region25
    $region24: #{tpu_custom_call.1} parent=1 // pred_region
      _
    $region25: #{tpu_custom_call.1} parent=1 // pred_fallthru
      _
    // Predicated region
    $region26: #{tpu_custom_call.1} parent=1 // pred_check
      _
    $region27: #{tpu_custom_call.1} parent=1 // pred_check_branch
      %73 = sbr.rel (0) target = $region29
    $region28: #{tpu_custom_call.1} parent=1 // pred_region
      %s75 = ssub.s32 32, 32
      %76 = vsyncadd [#allocation4], %s75
      %s78 = sshll.u32 [#allocation7], 4
      %s79 = int_to_ptr.vmem [resolvable:$true] %s78
      %81 = dma.vmem_to_hbm [thread:$0]  %s79, 32, %s4, [#allocation4]
    $region29: #{tpu_custom_call.1} parent=1 // pred_fallthru
      _
    // Predicated region
    $region30: #{tpu_custom_call.1} parent=1 // pred_check
      _
    $region31: #{tpu_custom_call.1} parent=1 // pred_check_branch
      %83 = sbr.rel (0) target = $region33
    $region32: #{tpu_custom_call.1} parent=1 // pred_region
      _
    $region33: #{tpu_custom_call.1} parent=1 // pred_fallthru
      _
    // Predicated region
    $region34: #{tpu_custom_call.1} parent=1 // pred_check
      _
    $region35: #{tpu_custom_call.1} parent=1 // pred_check_branch
      %85 = sbr.rel (0) target = $region37
    $region36: #{tpu_custom_call.1} parent=1 // pred_region
      %86 = dma.done [#allocation4], 32
    $region37: #{tpu_custom_call.1} parent=1 // pred_fallthru
      _
    %87 = vsyncpa [#allocation3], 1
    %88 = vsyncpa [#allocation6], 1
    %89 = vsyncpa [#allocation4], 1

</llo_original>
